<compile_context>
chip_gen: v5e
topology: v5e:2x2
jax: 0.10.0
libtpu: 0.0.40
codegen_flags: <defaults>
</compile_context>

<pallas_src>
import jax
import jax.numpy as jnp
from jax.experimental import pallas as pl
from jax.experimental.pallas import tpu as pltpu


def _round_up(x, m):
    return (x + m - 1) // m * m


# ---------------------------------------------------------------------------
# Fused kernel: conv-as-matmul + BN + ReLU + (spatial+temporal) GAP + last_linear
# ---------------------------------------------------------------------------
def _make_tsn_kernel(s_valid, t_frames, tile_s, need_mask):
    inv = 1.0 / float(s_valid * t_frames)

    def kernel(patches_ref, wconv_ref, scale_ref, shift_ref,
               wfc_ref, bfc_ref, out_ref, acc_ref):
        t = pl.program_id(1)
        st = pl.program_id(2)

        @pl.when((t == 0) & (st == 0))
        def _init():
            acc_ref[...] = jnp.zeros_like(acc_ref)

        # conv-as-matmul on this spatial tile: (TILE_S, K_pad) @ (K_pad, F_pad)
        feat = jnp.dot(patches_ref[0, 0], wconv_ref[...],
                       preferred_element_type=jnp.float32)
        # frozen (eval-mode) BatchNorm folded to scale/shift, then ReLU (f32 VPU)
        feat = jnp.maximum(feat * scale_ref[...] + shift_ref[...], 0.0)
        if need_mask:
            # zero the spatial rows that are pure padding (only on ragged tiles)
            row = (st * tile_s
                   + jax.lax.broadcasted_iota(jnp.int32, (tile_s, 1), 0))
            feat = jnp.where(row < s_valid, feat, 0.0)
        # global-average-pool accumulation (row-sum, XLU) into VMEM scratch;
        # accumulated across both spatial tiles and frames of this video.
        acc_ref[...] += jnp.sum(feat, axis=0, keepdims=True)

        @pl.when((t == pl.num_programs(1) - 1) & (st == pl.num_programs(2) - 1))
        def _finalize():
            pooled = acc_ref[...] * inv                        # (1, F_pad)
            logits = jnp.dot(pooled, wfc_ref[...],
                             preferred_element_type=jnp.float32) + bfc_ref[...]
            out_ref[...] = logits.reshape(out_ref.shape)

    return kernel


def tsn_video_logits(patches, wconv, scale, shift, wfc, bfc, s_valid, tile_s):
    """patches: (N, T, S_pad, K_pad) bf16 -> per-video logits (N, 1, C_pad) f32."""
    n, t, s_pad, k_pad = patches.shape
    f_pad = wconv.shape[1]
    c_pad = wfc.shape[1]
    n_st = s_pad // tile_s

    kernel = _make_tsn_kernel(s_valid, t, tile_s, s_pad != s_valid)

    grid_spec = pltpu.PrefetchScalarGridSpec(
        num_scalar_prefetch=0,
        grid=(n, t, n_st),
        in_specs=[
            pl.BlockSpec((1, 1, tile_s, k_pad),
                         lambda i, j, s: (i, j, s, 0)),          # patches
            pl.BlockSpec((k_pad, f_pad), lambda i, j, s: (0, 0)),  # wconv
            pl.BlockSpec((1, f_pad), lambda i, j, s: (0, 0)),      # scale
            pl.BlockSpec((1, f_pad), lambda i, j, s: (0, 0)),      # shift
            pl.BlockSpec((f_pad, c_pad), lambda i, j, s: (0, 0)),  # wfc
            pl.BlockSpec((1, c_pad), lambda i, j, s: (0, 0)),      # bfc
        ],
        out_specs=pl.BlockSpec((1, 1, c_pad), lambda i, j, s: (i, 0, 0)),
        scratch_shapes=[pltpu.VMEM((1, f_pad), jnp.float32)],
    )

    return pl.pallas_call(
        kernel,
        out_shape=jax.ShapeDtypeStruct((n, 1, c_pad), jnp.float32),
        grid_spec=grid_spec,
        compiler_params=pltpu.CompilerParams(
            dimension_semantics=("parallel", "arbitrary", "arbitrary"),
            vmem_limit_bytes=32 * 1024 * 1024),
    )(patches, wconv, scale, shift, wfc, bfc)


# ---------------------------------------------------------------------------
# Host-side glue
# ---------------------------------------------------------------------------
def im2col(x_nhwc, kh, kw, stride, pad):
    """Extract (kh, kw) patches; returns (NT, OH*OW, kh*kw*C), OH, OW."""
    NT, H, W, C = x_nhwc.shape
    xp = jnp.pad(x_nhwc, ((0, 0), (pad, pad), (pad, pad), (0, 0)))
    OH = (H + 2 * pad - kh) // stride + 1
    OW = (W + 2 * pad - kw) // stride + 1
    cols = []
    for i in range(kh):
        for j in range(kw):
            cols.append(xp[:, i:i + stride * OH:stride,
                           j:j + stride * OW:stride, :])
    patches = jnp.stack(cols, axis=3)              # (NT, OH, OW, kh*kw, C)
    patches = patches.reshape(NT, OH * OW, kh * kw * C)
    return patches, OH, OW


def tsn_forward(x, w_conv, scale, shift, w_fc, b_fc, stride, pad):
    """x: (N, C, T, H, W) -> (N, num_classes), matching the PyTorch forward."""
    N, C, T, H, W = x.shape
    KH, KW, _, F = w_conv.shape
    num_classes = w_fc.shape[1]
    NT = N * T

    # TSN glue: N C T H W -> N T C H W -> (N*T, C, H, W) -> NHWC (bf16 early)
    x_nt = jnp.transpose(x, (0, 2, 1, 3, 4)).reshape(NT, C, H, W)
    x_nhwc = jnp.transpose(x_nt, (0, 2, 3, 1)).astype(jnp.bfloat16)

    patches, OH, OW = im2col(x_nhwc, KH, KW, stride, pad)
    S = OH * OW
    K = KH * KW * C

    # MXU-friendly padding: K/F/num_classes padded to multiples of 128,
    # spatial tiled to TILE_S rows (multiple of 8).
    K_pad = _round_up(K, 128)
    F_pad = _round_up(F, 128)
    C_pad = _round_up(num_classes, 128)
    TILE_S = min(512, _round_up(S, 8))
    S_pad = _round_up(S, TILE_S)

    patches_p = jnp.pad(patches, ((0, 0), (0, S_pad - S), (0, K_pad - K)))
    patches_p = patches_p.reshape(N, T, S_pad, K_pad)
    wconv_p = jnp.pad(w_conv.reshape(K, F),
                      ((0, K_pad - K), (0, F_pad - F))).astype(jnp.bfloat16)
    scale_p = jnp.pad(scale, (0, F_pad - F)).reshape(1, F_pad)
    shift_p = jnp.pad(shift, (0, F_pad - F)).reshape(1, F_pad)
    wfc_p = jnp.pad(w_fc, ((0, F_pad - F), (0, C_pad - num_classes)))
    bfc_p = jnp.pad(b_fc, (0, C_pad - num_classes)).reshape(1, C_pad)

    video_logits = tsn_video_logits(patches_p, wconv_p, scale_p, shift_p,
                                    wfc_p, bfc_p, S, TILE_S)   # (N, 1, C_pad)
    return video_logits[:, 0, :num_classes]


if __name__ == "__main__":
    key = jax.random.PRNGKey(0)
    N, C, T, H, W = 2, 3, 4, 16, 16
    num_classes = 10
    F, KH, KW, stride, pad = 64, 7, 7, 2, 3

    keys = jax.random.split(key, 8)
    x = jax.random.normal(keys[0], (N, C, T, H, W), jnp.float32)
    w_conv = jax.random.normal(keys[1], (KH, KW, C, F), jnp.float32) * 0.05
    gamma = jax.random.normal(keys[2], (F,), jnp.float32) * 0.1 + 1.0
    beta = jax.random.normal(keys[3], (F,), jnp.float32) * 0.1
    run_mean = jax.random.normal(keys[4], (F,), jnp.float32) * 0.1
    run_var = jax.random.uniform(keys[5], (F,), jnp.float32, 0.5, 1.5)
    w_fc = jax.random.normal(keys[6], (F, num_classes), jnp.float32) * 0.1
    b_fc = jax.random.normal(keys[7], (num_classes,), jnp.float32) * 0.1

    # frozen (eval-mode) BatchNorm folded to scale/shift
    eps = 1e-5
    scale = gamma / jnp.sqrt(run_var + eps)
    shift = beta - run_mean * scale

    out = tsn_forward(x, w_conv, scale, shift, w_fc, b_fc, stride, pad)
    out = jax.block_until_ready(out)

    # pure-JAX f32 reference for correctness (per-frame fc then temporal mean;
    # identical to the fused temporal-mean-then-fc because fc is linear)
    x_nt = jnp.transpose(x, (0, 2, 1, 3, 4)).reshape(N * T, C, H, W)
    x_nhwc = jnp.transpose(x_nt, (0, 2, 3, 1))
    conv_ref = jax.lax.conv_general_dilated(
        x_nhwc, w_conv, (stride, stride), [(pad, pad), (pad, pad)],
        dimension_numbers=("NHWC", "HWIO", "NHWC"),
        precision=jax.lax.Precision.HIGHEST)
    feat_ref = jnp.maximum(conv_ref * scale + shift, 0.0)
    pooled_ref = feat_ref.mean(axis=(1, 2))
    logits_ref = pooled_ref @ w_fc + b_fc
    ref = logits_ref.reshape(N, T, num_classes).mean(axis=1)

    assert out.shape == (N, num_classes)
    # bf16 matmul operands (f32 accumulation) -> relaxed tolerance vs f32 ref
    assert jnp.allclose(out, ref, atol=2e-2, rtol=2e-2)
    print("KERNEL_OK")
</pallas_src>

<mosaic_0001>
module attributes {stable_mosaic.version = 11 : i64} {
  func.func @kernel(%arg0: i32, %arg1: i32, %arg2: i32, %arg3: memref<1x1x64x256xbf16, #tpu.memory_space<vmem>>, %arg4: memref<256x128xbf16, #tpu.memory_space<vmem>>, %arg5: memref<1x128xf32, #tpu.memory_space<vmem>>, %arg6: memref<1x128xf32, #tpu.memory_space<vmem>>, %arg7: memref<128x128xf32, #tpu.memory_space<vmem>>, %arg8: memref<1x128xf32, #tpu.memory_space<vmem>>, %arg9: memref<1x1x128xf32, #tpu.memory_space<vmem>>, %arg10: memref<1x128xf32, #tpu.memory_space<vmem>>) attributes {dimension_semantics = [#tpu.dimension_semantics<parallel>, #tpu.dimension_semantics<arbitrary>, #tpu.dimension_semantics<arbitrary>], iteration_bounds = array<i64: 2, 4, 1>, scalar_prefetch = 0 : i64, scratch_operands = 1 : i64, tpu.core_type = #tpu.core_type<tc>, window_params = [{transform_indices = @transform_0, window_bounds = array<i64: 1, 1, 64, 256>}, {pipeline_mode = #tpu.pipeline_mode<synchronous>, transform_indices = @transform_1, window_bounds = array<i64: 256, 128>}, {pipeline_mode = #tpu.pipeline_mode<synchronous>, transform_indices = @transform_2, window_bounds = array<i64: 1, 128>}, {pipeline_mode = #tpu.pipeline_mode<synchronous>, transform_indices = @transform_3, window_bounds = array<i64: 1, 128>}, {pipeline_mode = #tpu.pipeline_mode<synchronous>, transform_indices = @transform_4, window_bounds = array<i64: 128, 128>}, {pipeline_mode = #tpu.pipeline_mode<synchronous>, transform_indices = @transform_5, window_bounds = array<i64: 1, 128>}, {transform_indices = @transform_6, window_bounds = array<i64: 1, 1, 128>}]} {
    %c0_i32 = arith.constant 0 : i32
    %0 = arith.cmpi eq, %arg1, %c0_i32 : i32
    %c0_i32_0 = arith.constant 0 : i32
    %1 = arith.cmpi eq, %arg2, %c0_i32_0 : i32
    %2 = arith.andi %0, %1 : i1
    %3 = arith.extui %2 : i1 to i32
    %c0_i32_1 = arith.constant 0 : i32
    %4 = arith.cmpi ne, %3, %c0_i32_1 : i32
    scf.if %4 {
      %cst_19 = arith.constant 0.000000e+00 : f32
      %27 = vector.broadcast %cst_19 : f32 to vector<1x128xf32>
      %c0_20 = arith.constant 0 : index
      %c0_21 = arith.constant 0 : index
      %28 = vector.load %arg10[%c0_20, %c0_21] : memref<1x128xf32, #tpu.memory_space<vmem>>, vector<1x128xf32>
      tpu.vector_store %arg10[%c0_20, %c0_21], %27 {strides = array<i32>} : memref<1x128xf32, #tpu.memory_space<vmem>>, vector<1x128xf32>,
    } else {
    }
    %c0 = arith.constant 0 : index
    %c0_2 = arith.constant 0 : index
    %c0_3 = arith.constant 0 : index
    %c0_4 = arith.constant 0 : index
    %5 = vector.load %arg3[%c0, %c0_2, %c0_3, %c0_4] : memref<1x1x64x256xbf16, #tpu.memory_space<vmem>>, vector<1x1x64x256xbf16>
    %6 = vector.shape_cast %5 : vector<1x1x64x256xbf16> to vector<64x256xbf16>
    %c0_5 = arith.constant 0 : index
    %c0_6 = arith.constant 0 : index
    %7 = vector.load %arg4[%c0_5, %c0_6] : memref<256x128xbf16, #tpu.memory_space<vmem>>, vector<256x128xbf16>
    %cst = arith.constant dense<0.000000e+00> : vector<64x128xf32>
    %8 = tpu.matmul %6, %7, %cst {dimension_numbers = #tpu.dot_dimension_numbers<[1], [0], [0], [1], [0, 0, 1, 1], [], []>} : vector<64x256xbf16>, vector<256x128xbf16>, vector<64x128xf32> -> vector<64x128xf32>
    %c0_7 = arith.constant 0 : index
    %c0_8 = arith.constant 0 : index
    %9 = vector.load %arg5[%c0_7, %c0_8] : memref<1x128xf32, #tpu.memory_space<vmem>>, vector<1x128xf32>
    %10 = vector.broadcast %9 : vector<1x128xf32> to vector<64x128xf32>
    %11 = arith.mulf %8, %10 : vector<64x128xf32>
    %c0_9 = arith.constant 0 : index
    %c0_10 = arith.constant 0 : index
    %12 = vector.load %arg6[%c0_9, %c0_10] : memref<1x128xf32, #tpu.memory_space<vmem>>, vector<1x128xf32>
    %13 = vector.broadcast %12 : vector<1x128xf32> to vector<64x128xf32>
    %14 = arith.addf %11, %13 : vector<64x128xf32>
    %cst_11 = arith.constant 0.000000e+00 : f32
    %15 = vector.broadcast %cst_11 : f32 to vector<64x128xf32>
    %16 = arith.maximumf %14, %15 : vector<64x128xf32>
    %c0_12 = arith.constant 0 : index
    %c0_13 = arith.constant 0 : index
    %17 = vector.load %arg10[%c0_12, %c0_13] : memref<1x128xf32, #tpu.memory_space<vmem>>, vector<1x128xf32>
    %cst_14 = arith.constant dense<0.000000e+00> : vector<128xf32>
    %18 = vector.multi_reduction <add>, %16, %cst_14 [0] : vector<64x128xf32> to vector<128xf32>
    %19 = vector.shape_cast %18 : vector<128xf32> to vector<1x128xf32>
    %20 = arith.addf %17, %19 : vector<1x128xf32>
    %c0_15 = arith.constant 0 : index
    %c0_16 = arith.constant 0 : index
    %21 = vector.load %arg10[%c0_15, %c0_16] : memref<1x128xf32, #tpu.memory_space<vmem>>, vector<1x128xf32>
    tpu.vector_store %arg10[%c0_15, %c0_16], %20 {strides = array<i32>} : memref<1x128xf32, #tpu.memory_space<vmem>>, vector<1x128xf32>,
    %c3_i32 = arith.constant 3 : i32
    %22 = arith.cmpi eq, %arg1, %c3_i32 : i32
    %c0_i32_17 = arith.constant 0 : i32
    %23 = arith.cmpi eq, %arg2, %c0_i32_17 : i32
    %24 = arith.andi %22, %23 : i1
    %25 = arith.extui %24 : i1 to i32
    %c0_i32_18 = arith.constant 0 : i32
    %26 = arith.cmpi ne, %25, %c0_i32_18 : i32
    scf.if %26 {
      %c0_19 = arith.constant 0 : index
      %c0_20 = arith.constant 0 : index
      %27 = vector.load %arg10[%c0_19, %c0_20] : memref<1x128xf32, #tpu.memory_space<vmem>>, vector<1x128xf32>
      %cst_21 = arith.constant 3.906250e-03 : f32
      %28 = vector.broadcast %cst_21 : f32 to vector<1x128xf32>
      %29 = arith.mulf %27, %28 : vector<1x128xf32>
      %c0_22 = arith.constant 0 : index
      %c0_23 = arith.constant 0 : index
      %30 = vector.load %arg7[%c0_22, %c0_23] : memref<128x128xf32, #tpu.memory_space<vmem>>, vector<128x128xf32>
      %cst_24 = arith.constant dense<0.000000e+00> : vector<1x128xf32>
      %31 = tpu.matmul %29, %30, %cst_24 {dimension_numbers = #tpu.dot_dimension_numbers<[1], [0], [0], [1], [0, 0, 1, 1], [], []>} : vector<1x128xf32>, vector<128x128xf32>, vector<1x128xf32> -> vector<1x128xf32>
      %c0_25 = arith.constant 0 : index
      %c0_26 = arith.constant 0 : index
      %32 = vector.load %arg8[%c0_25, %c0_26] : memref<1x128xf32, #tpu.memory_space<vmem>>, vector<1x128xf32>
      %33 = arith.addf %31, %32 : vector<1x128xf32>
      %34 = vector.shape_cast %33 : vector<1x128xf32> to vector<1x1x128xf32>
      %c0_27 = arith.constant 0 : index
      %c0_28 = arith.constant 0 : index
      %c0_29 = arith.constant 0 : index
      %35 = vector.load %arg9[%c0_27, %c0_28, %c0_29] : memref<1x1x128xf32, #tpu.memory_space<vmem>>, vector<1x1x128xf32>
      tpu.vector_store %arg9[%c0_27, %c0_28, %c0_29], %34 {strides = array<i32>} : memref<1x1x128xf32, #tpu.memory_space<vmem>>, vector<1x1x128xf32>,
    } else {
    }
    return
  }
  func.func @transform_0(%arg0: i32, %arg1: i32, %arg2: i32) -> (i32, i32, i32, i32) {
    %c0_i32 = arith.constant 0 : i32
    %c0_i32_0 = arith.constant 0 : i32
    return %arg0, %arg1, %arg2, %c0_i32 : i32, i32, i32, i32
  }
  func.func @transform_1(%arg0: i32, %arg1: i32, %arg2: i32) -> (i32, i32) {
    %c0_i32 = arith.constant 0 : i32
    %c0_i32_0 = arith.constant 0 : i32
    %c0_i32_1 = arith.constant 0 : i32
    return %c0_i32, %c0_i32_0 : i32, i32
  }
  func.func @transform_2(%arg0: i32, %arg1: i32, %arg2: i32) -> (i32, i32) {
    %c0_i32 = arith.constant 0 : i32
    %c0_i32_0 = arith.constant 0 : i32
    %c0_i32_1 = arith.constant 0 : i32
    return %c0_i32, %c0_i32_0 : i32, i32
  }
  func.func @transform_3(%arg0: i32, %arg1: i32, %arg2: i32) -> (i32, i32) {
    %c0_i32 = arith.constant 0 : i32
    %c0_i32_0 = arith.constant 0 : i32
    %c0_i32_1 = arith.constant 0 : i32
    return %c0_i32, %c0_i32_0 : i32, i32
  }
  func.func @transform_4(%arg0: i32, %arg1: i32, %arg2: i32) -> (i32, i32) {
    %c0_i32 = arith.constant 0 : i32
    %c0_i32_0 = arith.constant 0 : i32
    %c0_i32_1 = arith.constant 0 : i32
    return %c0_i32, %c0_i32_0 : i32, i32
  }
  func.func @transform_5(%arg0: i32, %arg1: i32, %arg2: i32) -> (i32, i32) {
    %c0_i32 = arith.constant 0 : i32
    %c0_i32_0 = arith.constant 0 : i32
    %c0_i32_1 = arith.constant 0 : i32
    return %c0_i32, %c0_i32_0 : i32, i32
  }
  func.func @transform_6(%arg0: i32, %arg1: i32, %arg2: i32) -> (i32, i32, i32) {
    %c0_i32 = arith.constant 0 : i32
    %c0_i32_0 = arith.constant 0 : i32
    %c0_i32_1 = arith.constant 0 : i32
    return %arg0, %c0_i32, %c0_i32_0 : i32, i32, i32
  }
}

</mosaic_0001>

<llo_original>
// kernel: tpu_custom_call.1
$region0: #{tpu_custom_call.1}
  #allocation0 [shape = 'u32[]', space=smem, size = 0x4, offset = 0x4, fixed_abs, tag = 'smem constant byte address 0x4 - core index']
  #allocation1 [shape = 'u32[72,128]{1,0:T(1,128)}', space=vmem, size = 0x9000, scoped, tag = 'internal scratch']
  #allocation2 [shape = 'f32[1,128]{1,0:T(1,128)}', space=vmem, size = 0x200, scoped, tag = 'scratch operand']
  %s0 = inlined_call_operand.hbm [shape: bf16[2,4,64,256], index: 0, kind: input, shape index: {}]
  %s1 = inlined_call_operand.hbm [shape: bf16[256,128], index: 1, kind: input, shape index: {}]
  %s2 = inlined_call_operand.vmem [shape: f32[1,128], index: 2, kind: input, shape index: {}]
  %s3 = inlined_call_operand.vmem [shape: f32[1,128], index: 3, kind: input, shape index: {}]
  %s4 = inlined_call_operand.hbm [shape: f32[128,128], index: 4, kind: input, shape index: {}]
  %s5 = inlined_call_operand.vmem [shape: f32[1,128], index: 5, kind: input, shape index: {}]
  %s6 = inlined_call_operand.hbm [shape: f32[2,1,128], index: 6, kind: output, shape index: {}]
  %s7 = sld [smem:[#allocation0]]
  $region77: #{tpu_custom_call.1} parent=0
    _
  %s9 = ssub.s32 1, %s7
  %s10 = scalar_select 0, %s9, %s7
  $region1: #{tpu_custom_call.1} parent=0
    #allocation3 [shape = 'u8[65536]{0}', space=vmem, size = 0x10000, scoped, tag = 'input window, operand 0']
    #allocation4 [shape = 's32[2]{0}', space=sflag, size = 0x8, scoped, tag = 'scoped memory for tpu_custom_call.1']
    #allocation5 [shape = 's32[2]{0}', space=sflag, size = 0x8, scoped, tag = 'scoped memory for tpu_custom_call.1']
    #allocation6 [shape = 'u8[65536]{0}', space=vmem, size = 0x10000, scoped, tag = 'input window, operand 1, single buffered']
    #allocation7 [shape = 's32[1]{0}', space=sflag, size = 0x4, scoped, tag = 'scoped memory for tpu_custom_call.1']
    #allocation8 [shape = 'u8[65536]{0}', space=vmem, size = 0x10000, scoped, tag = 'input window, operand 4, single buffered']
    #allocation9 [shape = 'u8[1024]{0}', space=vmem, size = 0x400, scoped, tag = 'output window, operand 0']
    %11 = vsyncpa [#allocation4], 0
    %s12 = scalar_lea.sflag [#allocation4], 1
    %13 = vsyncpa %s12, 0
    %14 = vsyncpa [#allocation7], 0
    %15 = vsyncpa [#allocation5], 0
    %s16 = scalar_lea.sflag [#allocation5], 1
    %17 = vsyncpa %s16, 0
    loop: start=0, step=1, limit=10
    $region2: #{tpu_custom_call.1} parent=1 // loop_pre_header
      _
    $region3: #{tpu_custom_call.1} parent=1 // loop_header
      %s19 = sphi 0, %s23
      %p20 = scmp.ge.s32.totalorder %s19, 10
      %s26 = sphi 0, %s45
      %s27 = sphi 0, %s41
      %s28 = sphi 0, %s37
      %s29 = sphi 0, %s26
      %s30 = sphi 0, %s27
      %s31 = sphi 0, %s28
      %s32 = sphi 0, %s29
      %s33 = sphi 0, %s30
      %s34 = sphi 0, %s31
      %s52 = sphi 0, %s54
      %s55 = sphi 0, %s52
      %s56 = sphi 0, %s55
      %s72 = sphi 0, %s56
      %s76 = sphi 0, %s76
      %s78 = sphi 0, %s76
      %s79 = sphi 0, %s78
      %s93 = sphi 0, %s79
      %s97 = sphi 0, %s97
      %s99 = sphi 0, %s97
      %s100 = sphi 0, %s99
      %s114 = sphi 0, %s100
      %s118 = sphi 0, %s118
      %s120 = sphi 0, %s118
      %s121 = sphi 0, %s120
      %s135 = sphi 0, %s121
      %s139 = sphi 0, %s139
      %s141 = sphi 0, %s139
      %s142 = sphi 0, %s141
      %s156 = sphi 0, %s142
      %s160 = sphi 0, %s160
      %s162 = sphi 0, %s160
      %s163 = sphi 0, %s162
      %s177 = sphi 0, %s163
      %s183 = sphi 0, %s185
      %s186 = sphi 0, %s183
      %s187 = sphi 0, %s186
      %s203 = sphi 0, %s187
    $region4: #{tpu_custom_call.1} parent=1 // loop_header_branch
      %22 = sbr.rel (%p20) target = $region8
    $region5: #{tpu_custom_call.1} parent=1 // loop_body
      %s24 = ssub.s32 %s19, 1
      %s25 = ssub.s32 %s19, 2
      %s35 = sadd.s32 1, %s28
      %p36 = scmp.ge.s32.totalorder %s35, 1
      %s37 = scalar_select %p36, 0, %s35
      %s38 = sadd.s32 1, %s27
      %s39 = scalar_select %p36, %s38, %s27
      %p40 = scmp.ge.s32.totalorder %s39, 4
      %s41 = scalar_select %p40, 0, %s39
      %s42 = sadd.s32 1, %s26
      %s43 = scalar_select %p40, %s42, %s26
      %p44 = scmp.ge.s32.totalorder %s43, 2
      %s45 = scalar_select %p44, 0, %s43
      %s46 = ssub.s32 %s26, %s45
      %s47 = ssub.s32 %s27, %s41
      %s48 = sor.u32 %s46, %s47
      %s49 = ssub.s32 %s28, %s37
      %s50 = sor.u32 %s48, %s49
      %p51 = scmp.eq.s32.totalorder %s50, 0
      %s53 = sadd.s32 %s52, 1
      %s54 = scalar_select %p51, %s52, %s53
      %p57 = pneg %p51
      %p58 = scmp.eq.s32.totalorder %s19, 7
      %p59 = por %p57, %p58
      %p60 = scmp.ne.s32.totalorder %s52, %s55
      %p61 = scmp.eq.s32.totalorder %s19, 0
      %p62 = por %p60, %p61
      %p63 = scmp.ne.s32.totalorder %s52, %s55
      %p64 = scmp.eq.s32.totalorder %s24, 7
      %p65 = por %p63, %p64
      %p66 = scmp.ne.s32.totalorder %s55, %s56
      %p67 = scmp.eq.s32.totalorder %s24, 0
      %p68 = por %p66, %p67
      %p69 = scmp.ne.s32.totalorder %s55, %s56
      %p70 = scmp.eq.s32.totalorder %s25, 7
      %p71 = por %p69, %p70
      %p73 = scmp.ne.s32.totalorder %s56, %s72
      %p74 = scmp.eq.s32.totalorder %s25, 0
      %p75 = por %p73, %p74
      %s77 = sadd.s32 %s76, 1
      %p80 = scmp.eq.s32.totalorder %s19, 7
      %p81 = scmp.ne.s32.totalorder %s76, %s78
      %p82 = scmp.eq.s32.totalorder %s19, 0
      %p83 = por %p81, %p82
      %p84 = scmp.ne.s32.totalorder %s76, %s78
      %p85 = scmp.eq.s32.totalorder %s24, 7
      %p86 = por %p84, %p85
      %p87 = scmp.ne.s32.totalorder %s78, %s79
      %p88 = scmp.eq.s32.totalorder %s24, 0
      %p89 = por %p87, %p88
      %p90 = scmp.ne.s32.totalorder %s78, %s79
      %p91 = scmp.eq.s32.totalorder %s25, 7
      %p92 = por %p90, %p91
      %p94 = scmp.ne.s32.totalorder %s79, %s93
      %p95 = scmp.eq.s32.totalorder %s25, 0
      %p96 = por %p94, %p95
      %s98 = sadd.s32 %s97, 1
      %p101 = scmp.eq.s32.totalorder %s19, 7
      %p102 = scmp.ne.s32.totalorder %s97, %s99
      %p103 = scmp.eq.s32.totalorder %s19, 0
      %p104 = por %p102, %p103
      %p105 = scmp.ne.s32.totalorder %s97, %s99
      %p106 = scmp.eq.s32.totalorder %s24, 7
      %p107 = por %p105, %p106
      %p108 = scmp.ne.s32.totalorder %s99, %s100
      %p109 = scmp.eq.s32.totalorder %s24, 0
      %p110 = por %p108, %p109
      %p111 = scmp.ne.s32.totalorder %s99, %s100
      %p112 = scmp.eq.s32.totalorder %s25, 7
      %p113 = por %p111, %p112
      %p115 = scmp.ne.s32.totalorder %s100, %s114
      %p116 = scmp.eq.s32.totalorder %s25, 0
      %p117 = por %p115, %p116
      %s119 = sadd.s32 %s118, 1
      %p122 = scmp.eq.s32.totalorder %s19, 7
      %p123 = scmp.ne.s32.totalorder %s118, %s120
      %p124 = scmp.eq.s32.totalorder %s19, 0
      %p125 = por %p123, %p124
      %p126 = scmp.ne.s32.totalorder %s118, %s120
      %p127 = scmp.eq.s32.totalorder %s24, 7
      %p128 = por %p126, %p127
      %p129 = scmp.ne.s32.totalorder %s120, %s121
      %p130 = scmp.eq.s32.totalorder %s24, 0
      %p131 = por %p129, %p130
      %p132 = scmp.ne.s32.totalorder %s120, %s121
      %p133 = scmp.eq.s32.totalorder %s25, 7
      %p134 = por %p132, %p133
      %p136 = scmp.ne.s32.totalorder %s121, %s135
      %p137 = scmp.eq.s32.totalorder %s25, 0
      %p138 = por %p136, %p137
      %s140 = sadd.s32 %s139, 1
      %p143 = scmp.eq.s32.totalorder %s19, 7
      %p144 = scmp.ne.s32.totalorder %s139, %s141
      %p145 = scmp.eq.s32.totalorder %s19, 0
      %p146 = por %p144, %p145
      %p147 = scmp.ne.s32.totalorder %s139, %s141
      %p148 = scmp.eq.s32.totalorder %s24, 7
      %p149 = por %p147, %p148
      %p150 = scmp.ne.s32.totalorder %s141, %s142
      %p151 = scmp.eq.s32.totalorder %s24, 0
      %p152 = por %p150, %p151
      %p153 = scmp.ne.s32.totalorder %s141, %s142
      %p154 = scmp.eq.s32.totalorder %s25, 7
      %p155 = por %p153, %p154
      %p157 = scmp.ne.s32.totalorder %s142, %s156
      %p158 = scmp.eq.s32.totalorder %s25, 0
      %p159 = por %p157, %p158
      %s161 = sadd.s32 %s160, 1
      %p164 = scmp.eq.s32.totalorder %s19, 7
      %p165 = scmp.ne.s32.totalorder %s160, %s162
      %p166 = scmp.eq.s32.totalorder %s19, 0
      %p167 = por %p165, %p166
      %p168 = scmp.ne.s32.totalorder %s160, %s162
      %p169 = scmp.eq.s32.totalorder %s24, 7
      %p170 = por %p168, %p169
      %p171 = scmp.ne.s32.totalorder %s162, %s163
      %p172 = scmp.eq.s32.totalorder %s24, 0
      %p173 = por %p171, %p172
      %p174 = scmp.ne.s32.totalorder %s162, %s163
      %p175 = scmp.eq.s32.totalorder %s25, 7
      %p176 = por %p174, %p175
      %p178 = scmp.ne.s32.totalorder %s163, %s177
      %p179 = scmp.eq.s32.totalorder %s25, 0
      %p180 = por %p178, %p179
      %s181 = ssub.s32 %s26, %s45
      %p182 = scmp.eq.s32.totalorder %s181, 0
      %s184 = sadd.s32 %s183, 1
      %s185 = scalar_select %p182, %s183, %s184
      %p188 = pneg %p182
      %p189 = scmp.eq.s32.totalorder %s19, 7
      %p190 = por %p188, %p189
      %p191 = scmp.ne.s32.totalorder %s183, %s186
      %p192 = scmp.eq.s32.totalorder %s19, 0
      %p193 = por %p191, %p192
      %p194 = scmp.ne.s32.totalorder %s183, %s186
      %p195 = scmp.eq.s32.totalorder %s24, 7
      %p196 = por %p194, %p195
      %p197 = scmp.ne.s32.totalorder %s186, %s187
      %p198 = scmp.eq.s32.totalorder %s24, 0
      %p199 = por %p197, %p198
      %p200 = scmp.ne.s32.totalorder %s186, %s187
      %p201 = scmp.eq.s32.totalorder %s25, 7
      %p202 = por %p200, %p201
      %p204 = scmp.ne.s32.totalorder %s187, %s203
      %p205 = scmp.eq.s32.totalorder %s25, 0
      %p206 = por %p204, %p205
      %p207 = scmp.le.s32.totalorder 1, %s19
      %p208 = scmp.lt.s32.totalorder %s19, 9
      %p209 = pnand %p207, %p208
      %p210 = pneg %p209
      // Predicated region
      $region9: #{tpu_custom_call.1} parent=5 // pred_check
        _
      $region10: #{tpu_custom_call.1} parent=5 // pred_check_branch
        %212 = sbr.rel (%p209) target = $region12
      $region11: #{tpu_custom_call.1} parent=5 // pred_region
        %s213 = ssub.s32 %s19, 1
        // Predicated region
        $region13: #{tpu_custom_call.1} parent=11 // pred_check
          %p214 = pneg %p89
        $region14: #{tpu_custom_call.1} parent=11 // pred_check_branch
          %216 = sbr.rel (%p214) target = $region16
        $region15: #{tpu_custom_call.1} parent=11 // pred_region
          %218 = vsyncadd [#allocation7], 0
          %s219 = sshll.u32 %s1, 4
          %s220 = int_to_ptr.hbm [resolvable:$true] %s219
          %s221 = sshll.u32 [#allocation6], 4
          %s222 = int_to_ptr.vmem [resolvable:$true] %s221
          %227 = dma.hbm_to_vmem [thread:$0]  %s220, 2048, %s222, [#allocation7], 64, 64, 4
        $region16: #{tpu_custom_call.1} parent=11 // pred_fallthru
          _
        // Predicated region
        $region17: #{tpu_custom_call.1} parent=11 // pred_check
          %p228 = pneg %p110
        $region18: #{tpu_custom_call.1} parent=11 // pred_check_branch
          %230 = sbr.rel (%p228) target = $region20
        $region19: #{tpu_custom_call.1} parent=11 // pred_region
          _
        $region20: #{tpu_custom_call.1} parent=11 // pred_fallthru
          _
        // Predicated region
        $region21: #{tpu_custom_call.1} parent=11 // pred_check
          %p231 = pneg %p131
        $region22: #{tpu_custom_call.1} parent=11 // pred_check_branch
          %233 = sbr.rel (%p231) target = $region24
        $region23: #{tpu_custom_call.1} parent=11 // pred_region
          _
        $region24: #{tpu_custom_call.1} parent=11 // pred_fallthru
          _
        // Predicated region
        $region25: #{tpu_custom_call.1} parent=11 // pred_check
          %p234 = pneg %p152
        $region26: #{tpu_custom_call.1} parent=11 // pred_check_branch
          %236 = sbr.rel (%p234) target = $region28
        $region27: #{tpu_custom_call.1} parent=11 // pred_region
          %238 = vsyncadd [#allocation7], 0
          %s239 = sshll.u32 %s4, 4
          %s240 = int_to_ptr.hbm [resolvable:$true] %s239
          %s241 = sshll.u32 [#allocation8], 4
          %s242 = int_to_ptr.vmem [resolvable:$true] %s241
          %247 = dma.hbm_to_vmem [thread:$0]  %s240, 2048, %s242, [#allocation7], 128, 128, 8
        $region28: #{tpu_custom_call.1} parent=11 // pred_fallthru
          _
        // Predicated region
        $region29: #{tpu_custom_call.1} parent=11 // pred_check
          %p248 = pneg %p173
        $region30: #{tpu_custom_call.1} parent=11 // pred_check_branch
          %250 = sbr.rel (%p248) target = $region32
        $region31: #{tpu_custom_call.1} parent=11 // pred_region
          _
        $region32: #{tpu_custom_call.1} parent=11 // pred_fallthru
          _
      $region12: #{tpu_custom_call.1} parent=5 // pred_fallthru
        _
      %p251 = scmp.lt.s32.totalorder %s19, 8
      // Predicated region
      $region33: #{tpu_custom_call.1} parent=5 // pred_check
        %p252 = pneg %p251
      $region34: #{tpu_custom_call.1} parent=5 // pred_check_branch
        %254 = sbr.rel (%p252) target = $region36
      $region35: #{tpu_custom_call.1} parent=5 // pred_region
        // Predicated region
        $region37: #{tpu_custom_call.1} parent=35 // pred_check
          %p255 = pneg %p62
        $region38: #{tpu_custom_call.1} parent=35 // pred_check_branch
          %257 = sbr.rel (%p255) target = $region40
        $region39: #{tpu_custom_call.1} parent=35 // pred_region
          %s258 = sand.u32 %s52, 1
          %s259 = scalar_lea.sflag [#allocation4], %s258
          %s260 = sand.u32 %s52, 1
          %s261 = smul.addr %s260, 64
          %s262 = scalar_lea.vmem [#allocation3], %s261
          %s263 = smul.u32 8, %s28
          %265 = vsyncadd %s259, 0
          %s266 = smul.addr %s263, 2
          %s267 = smul.addr %s27, 16
          %s268 = sadd.s32 %s266, %s267
          %s269 = smul.addr %s26, 64
          %s270 = sadd.s32 %s268, %s269
          %s271 = smul.addr %s270, 4
          %s272 = scalar_lea.hbm %s0, %s271
          %s273 = sshll.u32 %s272, 4
          %s274 = int_to_ptr.hbm [resolvable:$true] %s273
          %s275 = sshll.u32 %s262, 4
          %s276 = int_to_ptr.vmem [resolvable:$true] %s275
          %281 = dma.hbm_to_vmem [thread:$0]  %s274, 1024, %s276, %s259, 128, 128, 8
        $region40: #{tpu_custom_call.1} parent=35 // pred_fallthru
          _
      $region36: #{tpu_custom_call.1} parent=5 // pred_fallthru
        _
      %p282 = scmp.le.s32.totalorder 1, %s19
      %p283 = scmp.lt.s32.totalorder %s19, 9
      %p284 = pnand %p282, %p283
      %p285 = pneg %p284
      // Predicated region
      $region41: #{tpu_custom_call.1} parent=5 // pred_check
        _
      $region42: #{tpu_custom_call.1} parent=5 // pred_check_branch
        %287 = sbr.rel (%p284) target = $region44
      $region43: #{tpu_custom_call.1} parent=5 // pred_region
        %s288 = ssub.s32 %s19, 1
        %s289 = sand.u32 %s55, 1
        %s290 = scalar_lea.sflag [#allocation4], %s289
        %s291 = sand.u32 %s55, 1
        %s292 = smul.addr %s291, 64
        %s293 = scalar_lea.vmem [#allocation3], %s292
        // Predicated region
        $region45: #{tpu_custom_call.1} parent=43 // pred_check
          %p294 = pneg %p68
        $region46: #{tpu_custom_call.1} parent=43 // pred_check_branch
          %296 = sbr.rel (%p294) target = $region48
        $region47: #{tpu_custom_call.1} parent=43 // pred_region
          %298 = dma.done %s290, 1024
        $region48: #{tpu_custom_call.1} parent=43 // pred_fallthru
          _
        // Predicated region
        $region49: #{tpu_custom_call.1} parent=43 // pred_check
          %p299 = pneg %p89
        $region50: #{tpu_custom_call.1} parent=43 // pred_check_branch
          %301 = sbr.rel (%p299) target = $region52
        $region51: #{tpu_custom_call.1} parent=43 // pred_region
          %303 = dma.done [#allocation7], 2048
        $region52: #{tpu_custom_call.1} parent=43 // pred_fallthru
          _
        // Predicated region
        $region53: #{tpu_custom_call.1} parent=43 // pred_check
          %p304 = pneg %p152
        $region54: #{tpu_custom_call.1} parent=43 // pred_check_branch
          %306 = sbr.rel (%p304) target = $region56
        $region55: #{tpu_custom_call.1} parent=43 // pred_region
          %308 = dma.done [#allocation7], 2048
        $region56: #{tpu_custom_call.1} parent=43 // pred_fallthru
          _
        %s309 = sand.u32 %s55, 1
        %s310 = scalar_lea.sflag [#allocation4], %s309
        %s311 = sand.u32 %s55, 1
        %s312 = smul.addr %s311, 64
        %s313 = scalar_lea.vmem [#allocation3], %s312
        %p314 = pneg %p68
        %p315 = pneg %p65
        %p316 = pneg %p89
        %p317 = pneg %p86
        %p318 = pneg %p110
        %p319 = pneg %p107
        %p320 = pneg %p131
        %p321 = pneg %p128
        %p322 = pneg %p152
        %p323 = pneg %p149
        %p324 = pneg %p173
        %p325 = pneg %p170
        %p326 = pneg %p199
        %p327 = pneg %p196
        %s328 = sand.u32 %s186, 1
        %s329 = scalar_lea.sflag [#allocation5], %s328
        %s330 = sand.u32 %s186, 1
        %s331 = scalar_lea.vmem [#allocation9], %s330
        %s332 = smul.u32 8, %s31
        %p333 = scmp.eq.s32.totalorder %s30, 0
        %p334 = scmp.eq.s32.totalorder %s31, 0
        %p335 = pnand %p333, %p334
        %p336 = pneg %p335
        // Predicated region
        $region57: #{tpu_custom_call.1} parent=43 // pred_check
          _
        $region58: #{tpu_custom_call.1} parent=43 // pred_check_branch
          %338 = sbr.rel (%p335) target = $region60
        $region59: #{tpu_custom_call.1} parent=43 // pred_region
          %339 = vst [vmem:[#allocation2] sm:$0x1] 0.0
        $region60: #{tpu_custom_call.1} parent=43 // pred_fallthru
          _
        %v340 = vld [vmem:[%s293] sm:$0xff]
        %v341 = vld [vmem:[%s293 + $0x8] sm:$0xff]
        %v342 = vld [vmem:[%s293 + $0x10] sm:$0xff]
        %v343 = vld [vmem:[%s293 + $0x18] sm:$0xff]
        %v344 = vld [vmem:[%s293 + $0x20] sm:$0xff]
        %v345 = vld [vmem:[%s293 + $0x28] sm:$0xff]
        %v346 = vld [vmem:[%s293 + $0x30] sm:$0xff]
        %v347 = vld [vmem:[%s293 + $0x38] sm:$0xff]
        %v348 = vld [vmem:[#allocation6] sm:$0xf]
        %v349 = vld [vmem:[#allocation6 + $0x4] sm:$0xf]
        %v350 = vld [vmem:[#allocation6 + $0x8] sm:$0xf]
        %v351 = vld [vmem:[#allocation6 + $0xc] sm:$0xf]
        %v352 = vld [vmem:[#allocation6 + $0x10] sm:$0xf]
        %v353 = vld [vmem:[#allocation6 + $0x14] sm:$0xf]
        %v354 = vld [vmem:[#allocation6 + $0x18] sm:$0xf]
        %v355 = vld [vmem:[#allocation6 + $0x1c] sm:$0xf]
        %v356 = vld [vmem:[#allocation6 + $0x20] sm:$0xf]
        %v357 = vld [vmem:[#allocation6 + $0x24] sm:$0xf]
        %v358 = vld [vmem:[#allocation6 + $0x28] sm:$0xf]
        %v359 = vld [vmem:[#allocation6 + $0x2c] sm:$0xf]
        %v360 = vld [vmem:[#allocation6 + $0x30] sm:$0xf]
        %v361 = vld [vmem:[#allocation6 + $0x34] sm:$0xf]
        %v362 = vld [vmem:[#allocation6 + $0x38] sm:$0xf]
        %v363 = vld [vmem:[#allocation6 + $0x3c] sm:$0xf]
        %v364 = vld [vmem:[#allocation6 + $0x40] sm:$0xf]
        %v365 = vld [vmem:[#allocation6 + $0x44] sm:$0xf]
        %v366 = vld [vmem:[#allocation6 + $0x48] sm:$0xf]
        %v367 = vld [vmem:[#allocation6 + $0x4c] sm:$0xf]
        %v368 = vld [vmem:[#allocation6 + $0x50] sm:$0xf]
        %v369 = vld [vmem:[#allocation6 + $0x54] sm:$0xf]
        %v370 = vld [vmem:[#allocation6 + $0x58] sm:$0xf]
        %v371 = vld [vmem:[#allocation6 + $0x5c] sm:$0xf]
        %v372 = vld [vmem:[#allocation6 + $0x60] sm:$0xf]
        %v373 = vld [vmem:[#allocation6 + $0x64] sm:$0xf]
        %v374 = vld [vmem:[#allocation6 + $0x68] sm:$0xf]
        %v375 = vld [vmem:[#allocation6 + $0x6c] sm:$0xf]
        %v376 = vld [vmem:[#allocation6 + $0x70] sm:$0xf]
        %v377 = vld [vmem:[#allocation6 + $0x74] sm:$0xf]
        %v378 = vld [vmem:[#allocation6 + $0x78] sm:$0xf]
        %v379 = vld [vmem:[#allocation6 + $0x7c] sm:$0xf]
        %v388 = vunpack.c.l.b16 %v340
        %v389 = vunpack.c.h.b16 %v340
        %v390 = vunpack.c.l.b16 %v341
        %v391 = vunpack.c.h.b16 %v341
        %v392 = vunpack.c.l.b16 %v342
        %v393 = vunpack.c.h.b16 %v342
        %v394 = vunpack.c.l.b16 %v343
        %v395 = vunpack.c.h.b16 %v343
        %v396 = vunpack.c.l.b16 %v344
        %v397 = vunpack.c.h.b16 %v344
        %v398 = vunpack.c.l.b16 %v345
        %v399 = vunpack.c.h.b16 %v345
        %v400 = vunpack.c.l.b16 %v346
        %v401 = vunpack.c.h.b16 %v346
        %v402 = vunpack.c.l.b16 %v347
        %v403 = vunpack.c.h.b16 %v347
        %v404 = vpack.c.b16 %v390, %v388
        %v405 = vpack.c.b16 %v391, %v389
        %v406 = vpack.c.b16 %v394, %v392
        %v407 = vpack.c.b16 %v395, %v393
        %v408 = vpack.c.b16 %v398, %v396
        %v409 = vpack.c.b16 %v399, %v397
        %v410 = vpack.c.b16 %v402, %v400
        %v411 = vpack.c.b16 %v403, %v401
        %v452 = vunpack.c.l.b16 %v348
        %v453 = vunpack.c.l.b16 %v349
        %v454 = vunpack.c.l.b16 %v350
        %v455 = vunpack.c.l.b16 %v351
        %v456 = vunpack.c.l.b16 %v352
        %v457 = vunpack.c.l.b16 %v353
        %v458 = vunpack.c.l.b16 %v354
        %v459 = vunpack.c.l.b16 %v355
        %v460 = vunpack.c.l.b16 %v356
        %v461 = vunpack.c.l.b16 %v357
        %v462 = vunpack.c.l.b16 %v358
        %v463 = vunpack.c.l.b16 %v359
        %v464 = vunpack.c.l.b16 %v360
        %v465 = vunpack.c.l.b16 %v361
        %v466 = vunpack.c.l.b16 %v362
        %v467 = vunpack.c.l.b16 %v363
        %v468 = vunpack.c.l.b16 %v364
        %v469 = vunpack.c.l.b16 %v365
        %v470 = vunpack.c.l.b16 %v366
        %v471 = vunpack.c.l.b16 %v367
        %v472 = vunpack.c.l.b16 %v368
        %v473 = vunpack.c.l.b16 %v369
        %v474 = vunpack.c.l.b16 %v370
        %v475 = vunpack.c.l.b16 %v371
        %v476 = vunpack.c.l.b16 %v372
        %v477 = vunpack.c.l.b16 %v373
        %v478 = vunpack.c.l.b16 %v374
        %v479 = vunpack.c.l.b16 %v375
        %v480 = vunpack.c.l.b16 %v376
        %v481 = vunpack.c.l.b16 %v377
        %v482 = vunpack.c.l.b16 %v378
        %v483 = vunpack.c.l.b16 %v379
        %v484 = vpack.c.b16 %v453, %v452
        %v485 = vpack.c.b16 %v455, %v454
        %v486 = vpack.c.b16 %v457, %v456
        %v487 = vpack.c.b16 %v459, %v458
        %v488 = vpack.c.b16 %v461, %v460
        %v489 = vpack.c.b16 %v463, %v462
        %v490 = vpack.c.b16 %v465, %v464
        %v491 = vpack.c.b16 %v467, %v466
        %v492 = vpack.c.b16 %v469, %v468
        %v493 = vpack.c.b16 %v471, %v470
        %v494 = vpack.c.b16 %v473, %v472
        %v495 = vpack.c.b16 %v475, %v474
        %v496 = vpack.c.b16 %v477, %v476
        %v497 = vpack.c.b16 %v479, %v478
        %v498 = vpack.c.b16 %v481, %v480
        %v499 = vpack.c.b16 %v483, %v482
        %516 = vmatpush.bf16.msra.mxu0 %v491
        %517 = vmatpush.bf16.msra.mxu0 %v490
        %518 = vmatpush.bf16.msra.mxu0 %v489
        %519 = vmatpush.bf16.msra.mxu0 %v488
        %520 = vmatpush.bf16.msra.mxu0 %v487
        %521 = vmatpush.bf16.msra.mxu0 %v486
        %522 = vmatpush.bf16.msra.mxu0 %v485
        %523 = vmatpush.bf16.msra.mxu0 %v484
        %524 = vmatmul.bf16.gmra.mxu0 %v404
        %v525 = vpop.f32.mrf.mxu0
        %v526 = vadd.f32 0.0, %v525
        %v527 = vpop.f32.mrf.mxu0
        %v528 = vadd.f32 0.0, %v527
        %529 = vmatmul.bf16.gmra.mxu0 %v406
        %v530 = vpop.f32.mrf.mxu0
        %v531 = vadd.f32 0.0, %v530
        %v532 = vpop.f32.mrf.mxu0
        %v533 = vadd.f32 0.0, %v532
        %534 = vmatmul.bf16.gmra.mxu0 %v408
        %v535 = vpop.f32.mrf.mxu0
        %v536 = vadd.f32 0.0, %v535
        %v537 = vpop.f32.mrf.mxu0
        %v538 = vadd.f32 0.0, %v537
        %539 = vmatmul.bf16.gmra.mxu0 %v410
        %v540 = vpop.f32.mrf.mxu0
        %v541 = vadd.f32 0.0, %v540
        %v542 = vpop.f32.mrf.mxu0
        %v543 = vadd.f32 0.0, %v542
        %544 = vdwg.mxu0
        %545 = vmatpush.bf16.msra.mxu0 %v499
        %546 = vmatpush.bf16.msra.mxu0 %v498
        %547 = vmatpush.bf16.msra.mxu0 %v497
        %548 = vmatpush.bf16.msra.mxu0 %v496
        %549 = vmatpush.bf16.msra.mxu0 %v495
        %550 = vmatpush.bf16.msra.mxu0 %v494
        %551 = vmatpush.bf16.msra.mxu0 %v493
        %552 = vmatpush.bf16.msra.mxu0 %v492
        %553 = vmatmul.bf16.gmra.mxu0 %v405
        %v554 = vpop.f32.mrf.mxu0
        %v555 = vadd.f32 %v526, %v554
        %v556 = vpop.f32.mrf.mxu0
        %v557 = vadd.f32 %v528, %v556
        %558 = vmatmul.bf16.gmra.mxu0 %v407
        %v559 = vpop.f32.mrf.mxu0
        %v560 = vadd.f32 %v531, %v559
        %v561 = vpop.f32.mrf.mxu0
        %v562 = vadd.f32 %v533, %v561
        %563 = vmatmul.bf16.gmra.mxu0 %v409
        %v564 = vpop.f32.mrf.mxu0
        %v565 = vadd.f32 %v536, %v564
        %v566 = vpop.f32.mrf.mxu0
        %v567 = vadd.f32 %v538, %v566
        %568 = vmatmul.bf16.gmra.mxu0 %v411
        %v569 = vpop.f32.mrf.mxu0
        %v570 = vadd.f32 %v541, %v569
        %v571 = vpop.f32.mrf.mxu0
        %v572 = vadd.f32 %v543, %v571
        %573 = vdwg.mxu0
        %v574 = vld [vmem:[%s2] sm:$0x1]
        %v576 = vperm.slane %v574, 0
        %v578 = vmul.f32 %v555, %v576
        %v579 = vmul.f32 %v557, %v576
        %v580 = vmul.f32 %v560, %v576
        %v581 = vmul.f32 %v562, %v576
        %v582 = vmul.f32 %v565, %v576
        %v583 = vmul.f32 %v567, %v576
        %v584 = vmul.f32 %v570, %v576
        %v585 = vmul.f32 %v572, %v576
        %v586 = vld [vmem:[%s3] sm:$0x1]
        %v588 = vperm.slane %v586, 0
        %v590 = vadd.f32 %v578, %v588
        %v591 = vadd.f32 %v579, %v588
        %v592 = vadd.f32 %v580, %v588
        %v593 = vadd.f32 %v581, %v588
        %v594 = vadd.f32 %v582, %v588
        %v595 = vadd.f32 %v583, %v588
        %v596 = vadd.f32 %v584, %v588
        %v597 = vadd.f32 %v585, %v588
        %v598 = vmax.f32 %v590, 0.0
        %v599 = vmax.f32 %v591, 0.0
        %v600 = vmax.f32 %v592, 0.0
        %v601 = vmax.f32 %v593, 0.0
        %v602 = vmax.f32 %v594, 0.0
        %v603 = vmax.f32 %v595, 0.0
        %v604 = vmax.f32 %v596, 0.0
        %v605 = vmax.f32 %v597, 0.0
        %v606 = vld [vmem:[#allocation2] sm:$0x1]
        %v607 = vadd.f32 %v598, %v599
        %v608 = vadd.f32 %v607, %v600
        %v609 = vadd.f32 %v608, %v601
        %v610 = vadd.f32 %v609, %v602
        %v611 = vadd.f32 %v610, %v603
        %v612 = vadd.f32 %v611, %v604
        %v613 = vadd.f32 %v612, %v605
        %v614 = vrot.slane %v613, 4
        %v615 = vadd.f32 %v613, %v614
        %v616 = vrot.slane %v615, 2
        %v617 = vadd.f32 %v615, %v616
        %v618 = vrot.slane %v617, 1
        %v619 = vadd.f32 %v617, %v618
        %v620 = vadd.f32 %v606, %v619
        %621 = vst [vmem:[#allocation2] sm:$0x1] %v620
        %p622 = scmp.eq.s32.totalorder %s30, 3
        %p623 = pnand %p622, %p334
        %p624 = pneg %p623
        // Predicated region
        $region61: #{tpu_custom_call.1} parent=43 // pred_check
          _
        $region62: #{tpu_custom_call.1} parent=43 // pred_check_branch
          %626 = sbr.rel (%p623) target = $region64
        $region63: #{tpu_custom_call.1} parent=43 // pred_region
          %v627 = vld [vmem:[#allocation2] sm:$0x1]
          %v628 = vmul.f32 %v627, 0.00390625
          %v629 = vld [vmem:[#allocation8] sm:$0xff]
          %v630 = vld [vmem:[#allocation8 + $0x8] sm:$0xff]
          %v631 = vld [vmem:[#allocation8 + $0x10] sm:$0xff]
          %v632 = vld [vmem:[#allocation8 + $0x18] sm:$0xff]
          %v633 = vld [vmem:[#allocation8 + $0x20] sm:$0xff]
          %v634 = vld [vmem:[#allocation8 + $0x28] sm:$0xff]
          %v635 = vld [vmem:[#allocation8 + $0x30] sm:$0xff]
          %v636 = vld [vmem:[#allocation8 + $0x38] sm:$0xff]
          %v637 = vld [vmem:[#allocation8 + $0x40] sm:$0xff]
          %v638 = vld [vmem:[#allocation8 + $0x48] sm:$0xff]
          %v639 = vld [vmem:[#allocation8 + $0x50] sm:$0xff]
          %v640 = vld [vmem:[#allocation8 + $0x58] sm:$0xff]
          %v641 = vld [vmem:[#allocation8 + $0x60] sm:$0xff]
          %v642 = vld [vmem:[#allocation8 + $0x68] sm:$0xff]
          %v643 = vld [vmem:[#allocation8 + $0x70] sm:$0xff]
          %v644 = vld [vmem:[#allocation8 + $0x78] sm:$0xff]
          %v645 = vld [vmem:[%s5] sm:$0x1]
          %646 = vmatpush.msra.mxu0 %v644
          %647 = vmatpush.msra.mxu0 %v643
          %648 = vmatpush.msra.mxu0 %v642
          %649 = vmatpush.msra.mxu0 %v641
          %650 = vmatpush.msra.mxu0 %v640
          %651 = vmatpush.msra.mxu0 %v639
          %652 = vmatpush.msra.mxu0 %v638
          %653 = vmatpush.msra.mxu0 %v637
          %654 = vmatpush.msra.mxu0 %v636
          %655 = vmatpush.msra.mxu0 %v635
          %656 = vmatpush.msra.mxu0 %v634
          %657 = vmatpush.msra.mxu0 %v633
          %658 = vmatpush.msra.mxu0 %v632
          %659 = vmatpush.msra.mxu0 %v631
          %660 = vmatpush.msra.mxu0 %v630
          %661 = vmatpush.msra.mxu0 %v629
          %662 = vmatmul.f32.gmra.mxu0 %v628
          %v663 = vpop.f32.mrf.mxu0
          %v664 = vadd.f32 %v645, %v663
          %665 = vdwg.mxu0
          %666 = vst [vmem:[%s331] sm:$0x1] %v664
        $region64: #{tpu_custom_call.1} parent=43 // pred_fallthru
          _
        %s667 = sand.u32 %s186, 1
        %s668 = scalar_lea.sflag [#allocation5], %s667
        %s669 = sand.u32 %s186, 1
        %s670 = scalar_lea.vmem [#allocation9], %s669
        // Predicated region
        $region65: #{tpu_custom_call.1} parent=43 // pred_check
          %p671 = pneg %p196
        $region66: #{tpu_custom_call.1} parent=43 // pred_check_branch
          %673 = sbr.rel (%p671) target = $region68
        $region67: #{tpu_custom_call.1} parent=43 // pred_region
          %675 = vsyncadd %s668, 0
          %s676 = scalar_lea.hbm %s6, %s29
          %s678 = sshll.u32 %s670, 4
          %s679 = int_to_ptr.vmem [resolvable:$true] %s678
          %s680 = sshll.u32 %s676, 4
          %s681 = int_to_ptr.hbm [resolvable:$true] %s680
          %683 = dma.vmem_to_hbm [thread:$0]  %s679, 16, %s681, %s668
        $region68: #{tpu_custom_call.1} parent=43 // pred_fallthru
          _
      $region44: #{tpu_custom_call.1} parent=5 // pred_fallthru
        _
      %p684 = scmp.le.s32.totalorder 2, %s19
      // Predicated region
      $region69: #{tpu_custom_call.1} parent=5 // pred_check
        %p685 = pneg %p684
      $region70: #{tpu_custom_call.1} parent=5 // pred_check_branch
        %687 = sbr.rel (%p685) target = $region72
      $region71: #{tpu_custom_call.1} parent=5 // pred_region
        %s688 = ssub.s32 %s19, 2
        // Predicated region
        $region73: #{tpu_custom_call.1} parent=71 // pred_check
          %p689 = pneg %p202
        $region74: #{tpu_custom_call.1} parent=71 // pred_check_branch
          %691 = sbr.rel (%p689) target = $region76
        $region75: #{tpu_custom_call.1} parent=71 // pred_region
          %s692 = sand.u32 %s187, 1
          %s693 = scalar_lea.sflag [#allocation5], %s692
          %s694 = sand.u32 %s187, 1
          %s695 = scalar_lea.vmem [#allocation9], %s694
          %697 = dma.done %s693, 16
        $region76: #{tpu_custom_call.1} parent=71 // pred_fallthru
          _
      $region72: #{tpu_custom_call.1} parent=5 // pred_fallthru
        _
    $region6: #{tpu_custom_call.1} parent=1 // loop_footer
      %s23 = sadd.s32 1, %s19
    $region7: #{tpu_custom_call.1} parent=1 // loop_footer_branch
      %18 = sbr.rel target = $region3
    $region8: #{tpu_custom_call.1} parent=1 // loop_exit
      _
    %698 = vsyncpa [#allocation4], 1
    %s699 = scalar_lea.sflag [#allocation4], 1
    %700 = vsyncpa %s699, 1
    %701 = vsyncpa [#allocation7], 1
    %702 = vsyncpa [#allocation5], 1
    %s703 = scalar_lea.sflag [#allocation5], 1
    %704 = vsyncpa %s703, 1

</llo_original>
